<compile_context>
chip_gen: v5e
topology: v5e:2x2
jax: 0.10.0
libtpu: 0.0.40
codegen_flags: <defaults>
</compile_context>

<pallas_src>
import functools

import jax
import jax.numpy as jnp
from jax.experimental import pallas as pl
from jax.experimental.pallas import tpu as pltpu


# ----------------------------------------------------------------------------
# Fused MHA kernel. Grid = (batch-blocks, query-tiles).
# Ref order: q, k, v, Wq^T, Wk^T, [Wv^T], Wo^T, bq, bk, [bv], bo,
#            out, [attw], o_scratch
# ----------------------------------------------------------------------------
def _fused_mha_kernel(*refs, num_heads, proj_value, output_weights, mxu_dtype):
    f32 = jnp.float32

    q_in, k_in, v_in, wq, wk = refs[:5]
    if proj_value:
        wv, wo, bq, bk, bv, bo = refs[5:11]
        nxt = 11
    else:
        wo, bq, bk, bo = refs[5:9]
        nxt = 9
    out_ref = refs[nxt]
    if output_weights:
        attw_ref = refs[nxt + 1]
        o_scr = refs[nxt + 2]
    else:
        o_scr = refs[nxt + 1]

    bblk, tq, c = q_in.shape
    s = k_in.shape[1]
    d = c // num_heads

    # Flatten the batch-block so the projections see Bblk*rows on the MXU.
    xq = q_in[...].reshape(bblk * tq, c)            # mxu_dtype (cast in wrapper)
    xk = k_in[...].reshape(bblk * s, c)
    xv = v_in[...].reshape(bblk * s, c)

    # ---- input projections (weights pre-transposed to (Cin, Cout); scale folded
    # ---- into Wq^T / bq in the wrapper). f32 accumulation + f32 bias add. ----
    q = jnp.dot(xq, wq[...], preferred_element_type=f32) + bq[...]
    k = jnp.dot(xk, wk[...], preferred_element_type=f32) + bk[...]

    # Cast once for the MXU (no-op when mxu_dtype == f32).
    q_m = q.astype(mxu_dtype)
    k_m = k.astype(mxu_dtype)
    if proj_value:
        v = jnp.dot(xv, wv[...], preferred_element_type=f32) + bv[...]
        v_m = v.astype(mxu_dtype)
    else:
        v_m = xv                                    # already mxu_dtype

    inv_h = 1.0 / num_heads
    for bi in range(bblk):                          # static unroll (small bblk)
        q_b = q_m[bi * tq:(bi + 1) * tq, :]         # (TQ, C)
        k_b = k_m[bi * s:(bi + 1) * s, :]           # (S, C)
        v_b = v_m[bi * s:(bi + 1) * s, :]           # (S, C)
        kT_b = k_b.T                                # (C, S): one transpose / batch
        if output_weights:
            w_sum = jnp.zeros((tq, s), f32)
        for h in range(num_heads):                  # static unroll (few heads)
            lo = h * d
            sc = jnp.dot(q_b[:, lo:lo + d], kT_b[lo:lo + d, :],
                         preferred_element_type=f32)            # (TQ, S) f32
            m = jnp.max(sc, axis=-1, keepdims=True)
            p = jnp.exp(sc - m)
            l = jnp.sum(p, axis=-1, keepdims=True)
            w = p * pl.reciprocal(l, approx=True)               # softmax (f32)
            if output_weights:
                w_sum = w_sum + w
            oh = jnp.dot(w.astype(mxu_dtype), v_b[:, lo:lo + d],
                         preferred_element_type=f32)            # (TQ, d) f32
            # Write this head's tile straight into the VMEM slab (no concat).
            o_scr[bi * tq:(bi + 1) * tq, lo:lo + d] = oh
        if output_weights:
            attw_ref[bi] = (w_sum * inv_h).astype(attw_ref.dtype)

    # ---- output projection on the whole (Bblk*TQ, C) slab ----
    out = jnp.dot(o_scr[...].astype(mxu_dtype), wo[...],
                  preferred_element_type=f32) + bo[...]
    out_ref[...] = out.reshape(bblk, tq, c).astype(out_ref.dtype)


def _pick_block(n, cap):
    """Largest divisor of n that is <= cap, preferring multiples of 8."""
    cap = max(1, min(n, cap))
    fallback = 1
    for cand in range(cap, 0, -1):
        if n % cand == 0:
            if cand % 8 == 0 or cand == n:
                return cand
            if fallback == 1:
                fallback = cand
    return fallback


# ----------------------------------------------------------------------------
# Wrapper (mirrors CustomMultiHeadAttention.forward, masks=None, dropout=0).
# ----------------------------------------------------------------------------
def custom_mha_forward(query, key, value, params, num_heads,
                       proj_value=True, output_weights=True,
                       mxu_dtype=jnp.float32, vmem_limit_bytes=None):
    t, b, c = query.shape
    s = key.shape[0]
    head_dim = c // num_heads
    scale = float(head_dim) ** (-0.5)

    # Batch-major once; cast MXU operands once here (not per head in-kernel).
    qb = jnp.transpose(query, (1, 0, 2)).astype(mxu_dtype)   # (B, T, C)
    kb = jnp.transpose(key, (1, 0, 2)).astype(mxu_dtype)     # (B, S, C)
    vb = jnp.transpose(value, (1, 0, 2)).astype(mxu_dtype)   # (B, S, C)

    # Pre-transpose projection weights to (Cin, Cout); fold 1/sqrt(d) into Wq/bq.
    wq_t = (params["wq"].T * scale).astype(mxu_dtype)
    wk_t = params["wk"].T.astype(mxu_dtype)
    wo_t = params["wo"].T.astype(mxu_dtype)
    bq = (params["bq"] * scale).reshape(1, c).astype(jnp.float32)
    bk = params["bk"].reshape(1, c).astype(jnp.float32)
    bo = params["bo"].reshape(1, c).astype(jnp.float32)

    # Query-tile + batch-block grid: bounds per-step VMEM and amortizes the
    # ~0.35us per-step overhead for small-T OCR shapes.
    tq = _pick_block(t, 256)
    bblk = _pick_block(b, max(1, 256 // tq))
    if b >= 2 and b // bblk < 2:
        bblk = _pick_block(b, max(1, b // 2))     # keep both TensorCores busy
    grid = (b // bblk, t // tq)

    full2d = lambda bi, ti: (0, 0)
    in_specs = [
        pl.BlockSpec((bblk, tq, c), lambda bi, ti: (bi, ti, 0)),   # query tile
        pl.BlockSpec((bblk, s, c), lambda bi, ti: (bi, 0, 0)),     # key (resident)
        pl.BlockSpec((bblk, s, c), lambda bi, ti: (bi, 0, 0)),     # value (resident)
        pl.BlockSpec((c, c), full2d),                              # Wq^T (scaled)
        pl.BlockSpec((c, c), full2d),                              # Wk^T
    ]
    args = [qb, kb, vb, wq_t, wk_t]
    if proj_value:
        wv_t = params["wv"].T.astype(mxu_dtype)
        bv = params["bv"].reshape(1, c).astype(jnp.float32)
        in_specs.append(pl.BlockSpec((c, c), full2d))              # Wv^T
        args.append(wv_t)
    in_specs.append(pl.BlockSpec((c, c), full2d))                  # Wo^T
    args.append(wo_t)
    in_specs.append(pl.BlockSpec((1, c), full2d))                  # bq (scaled)
    args.append(bq)
    in_specs.append(pl.BlockSpec((1, c), full2d))                  # bk
    args.append(bk)
    if proj_value:
        in_specs.append(pl.BlockSpec((1, c), full2d))              # bv
        args.append(bv)
    in_specs.append(pl.BlockSpec((1, c), full2d))                  # bo
    args.append(bo)

    out_sds = jax.ShapeDtypeStruct((b, t, c), query.dtype)
    out_spec = pl.BlockSpec((bblk, tq, c), lambda bi, ti: (bi, ti, 0))
    if output_weights:
        out_shape = (out_sds, jax.ShapeDtypeStruct((b, t, s), jnp.float32))
        out_specs = (out_spec,
                     pl.BlockSpec((bblk, tq, s), lambda bi, ti: (bi, ti, 0)))
    else:
        out_shape = out_sds
        out_specs = out_spec

    kernel = functools.partial(
        _fused_mha_kernel, num_heads=num_heads, proj_value=proj_value,
        output_weights=output_weights, mxu_dtype=mxu_dtype)

    result = pl.pallas_call(
        kernel,
        out_shape=out_shape,
        grid=grid,
        in_specs=in_specs,
        out_specs=out_specs,
        scratch_shapes=[pltpu.VMEM((bblk * tq, c), jnp.float32)],  # head-output slab
        compiler_params=pltpu.CompilerParams(
            dimension_semantics=("parallel", "parallel"),
            vmem_limit_bytes=vmem_limit_bytes),
    )(*args)

    if output_weights:
        out_b, attw = result
        return jnp.transpose(out_b, (1, 0, 2)), attw               # (T,B,C), (B,T,S)
    return jnp.transpose(result, (1, 0, 2))


# ----------------------------------------------------------------------------
# Pure-JAX reference (mirrors the PyTorch module) for a correctness check.
# ----------------------------------------------------------------------------
def mha_reference(query, key, value, params, num_heads, proj_value=True):
    t, b, c = query.shape
    s = key.shape[0]
    d = c // num_heads
    scale = float(d) ** (-0.5)
    q = query @ params["wq"].T + params["bq"]
    k = key @ params["wk"].T + params["bk"]
    v = (value @ params["wv"].T + params["bv"]) if proj_value else value
    q = q * scale
    q = q.reshape(t, b * num_heads, d).transpose(1, 0, 2)
    k = k.reshape(s, b * num_heads, d).transpose(1, 0, 2)
    v = v.reshape(s, b * num_heads, d).transpose(1, 0, 2)
    w = jax.nn.softmax(jnp.einsum("btd,bsd->bts", q, k), axis=-1)
    o = jnp.einsum("bts,bsd->btd", w, v)
    o = o.transpose(1, 0, 2).reshape(t, b, c)
    out = o @ params["wo"].T + params["bo"]
    attw = w.reshape(b, num_heads, t, s).sum(axis=1) / num_heads
    return out, attw


# ----------------------------------------------------------------------------
# Deterministic parameter construction (synthetic, no checkpoint load).
# ----------------------------------------------------------------------------
def make_params(key, embed_dim):
    keys = jax.random.split(key, 8)
    sc = 0.02

    def w(k):
        return jax.random.normal(k, (embed_dim, embed_dim), jnp.float32) * sc

    def bias(k):
        return jax.random.normal(k, (embed_dim,), jnp.float32) * sc

    return {
        "wq": w(keys[0]), "bq": bias(keys[1]),
        "wk": w(keys[2]), "bk": bias(keys[3]),
        "wv": w(keys[4]), "bv": bias(keys[5]),
        "wo": w(keys[6]), "bo": bias(keys[7]),
    }


if __name__ == "__main__":
    embed_dim = 32
    num_heads = 4
    target_len = 8
    source_len = 8
    batch = 2

    root = jax.random.PRNGKey(0)
    k_param, k_q, k_k, k_v = jax.random.split(root, 4)

    params = make_params(k_param, embed_dim)
    query = jax.random.normal(k_q, (target_len, batch, embed_dim), jnp.float32)
    key_in = jax.random.normal(k_k, (source_len, batch, embed_dim), jnp.float32)
    value = jax.random.normal(k_v, (source_len, batch, embed_dim), jnp.float32)

    fwd = jax.jit(functools.partial(
        custom_mha_forward, num_heads=num_heads,
        proj_value=True, output_weights=True, mxu_dtype=jnp.float32))

    out, attn_weights = fwd(query, key_in, value, params)
    jax.block_until_ready((out, attn_weights))

    assert out.shape == (target_len, batch, embed_dim)
    assert attn_weights.shape == (batch, target_len, source_len)

    # Correctness check against the pure-JAX reference (tolerance covers the
    # approximate EUP reciprocal used for the softmax denominator).
    out_ref, attw_ref = mha_reference(query, key_in, value, params, num_heads, True)
    assert float(jnp.max(jnp.abs(out - out_ref))) < 2e-3
    assert float(jnp.max(jnp.abs(attn_weights - attw_ref))) < 2e-3

    # TODO(synk): key_padding_mask / attn_mask / dropout>0 paths of the module
    # are not exercised here (forward called with masks=None, dropout=0).

    print("KERNEL_OK")
</pallas_src>

<mosaic_0001>
module attributes {stable_mosaic.version = 11 : i64} {
  func.func @_fused_mha_kernel(%arg0: i32, %arg1: i32, %arg2: memref<1x8x32xf32, #tpu.memory_space<vmem>>, %arg3: memref<1x8x32xf32, #tpu.memory_space<vmem>>, %arg4: memref<1x8x32xf32, #tpu.memory_space<vmem>>, %arg5: memref<32x32xf32, #tpu.memory_space<vmem>>, %arg6: memref<32x32xf32, #tpu.memory_space<vmem>>, %arg7: memref<32x32xf32, #tpu.memory_space<vmem>>, %arg8: memref<32x32xf32, #tpu.memory_space<vmem>>, %arg9: memref<1x32xf32, #tpu.memory_space<vmem>>, %arg10: memref<1x32xf32, #tpu.memory_space<vmem>>, %arg11: memref<1x32xf32, #tpu.memory_space<vmem>>, %arg12: memref<1x32xf32, #tpu.memory_space<vmem>>, %arg13: memref<1x8x32xf32, #tpu.memory_space<vmem>>, %arg14: memref<1x8x8xf32, #tpu.memory_space<vmem>>, %arg15: memref<8x32xf32, #tpu.memory_space<vmem>>) attributes {dimension_semantics = [#tpu.dimension_semantics<parallel>, #tpu.dimension_semantics<parallel>], iteration_bounds = array<i64: 2, 1>, scalar_prefetch = 0 : i64, scratch_operands = 1 : i64, tpu.core_type = #tpu.core_type<tc>, window_params = [{transform_indices = @transform_0, window_bounds = array<i64: 1, 8, 32>}, {transform_indices = @transform_1, window_bounds = array<i64: 1, 8, 32>}, {transform_indices = @transform_2, window_bounds = array<i64: 1, 8, 32>}, {pipeline_mode = #tpu.pipeline_mode<synchronous>, transform_indices = @transform_3, window_bounds = array<i64: 32, 32>}, {pipeline_mode = #tpu.pipeline_mode<synchronous>, transform_indices = @transform_4, window_bounds = array<i64: 32, 32>}, {pipeline_mode = #tpu.pipeline_mode<synchronous>, transform_indices = @transform_5, window_bounds = array<i64: 32, 32>}, {pipeline_mode = #tpu.pipeline_mode<synchronous>, transform_indices = @transform_6, window_bounds = array<i64: 32, 32>}, {pipeline_mode = #tpu.pipeline_mode<synchronous>, transform_indices = @transform_7, window_bounds = array<i64: 1, 32>}, {pipeline_mode = #tpu.pipeline_mode<synchronous>, transform_indices = @transform_8, window_bounds = array<i64: 1, 32>}, {pipeline_mode = #tpu.pipeline_mode<synchronous>, transform_indices = @transform_9, window_bounds = array<i64: 1, 32>}, {pipeline_mode = #tpu.pipeline_mode<synchronous>, transform_indices = @transform_10, window_bounds = array<i64: 1, 32>}, {transform_indices = @transform_11, window_bounds = array<i64: 1, 8, 32>}, {transform_indices = @transform_12, window_bounds = array<i64: 1, 8, 8>}]} {
    %c0 = arith.constant 0 : index
    %c0_0 = arith.constant 0 : index
    %c0_1 = arith.constant 0 : index
    %0 = vector.load %arg2[%c0, %c0_0, %c0_1] : memref<1x8x32xf32, #tpu.memory_space<vmem>>, vector<1x8x32xf32>
    %1 = vector.shape_cast %0 : vector<1x8x32xf32> to vector<8x32xf32>
    %c0_2 = arith.constant 0 : index
    %c0_3 = arith.constant 0 : index
    %c0_4 = arith.constant 0 : index
    %2 = vector.load %arg3[%c0_2, %c0_3, %c0_4] : memref<1x8x32xf32, #tpu.memory_space<vmem>>, vector<1x8x32xf32>
    %3 = vector.shape_cast %2 : vector<1x8x32xf32> to vector<8x32xf32>
    %c0_5 = arith.constant 0 : index
    %c0_6 = arith.constant 0 : index
    %c0_7 = arith.constant 0 : index
    %4 = vector.load %arg4[%c0_5, %c0_6, %c0_7] : memref<1x8x32xf32, #tpu.memory_space<vmem>>, vector<1x8x32xf32>
    %5 = vector.shape_cast %4 : vector<1x8x32xf32> to vector<8x32xf32>
    %c0_8 = arith.constant 0 : index
    %c0_9 = arith.constant 0 : index
    %6 = vector.load %arg5[%c0_8, %c0_9] : memref<32x32xf32, #tpu.memory_space<vmem>>, vector<32x32xf32>
    %cst = arith.constant dense<0.000000e+00> : vector<8x32xf32>
    %7 = tpu.matmul %1, %6, %cst {dimension_numbers = #tpu.dot_dimension_numbers<[1], [0], [0], [1], [0, 0, 1, 1], [], []>} : vector<8x32xf32>, vector<32x32xf32>, vector<8x32xf32> -> vector<8x32xf32>
    %c0_10 = arith.constant 0 : index
    %c0_11 = arith.constant 0 : index
    %8 = vector.load %arg9[%c0_10, %c0_11] : memref<1x32xf32, #tpu.memory_space<vmem>>, vector<1x32xf32>
    %9 = vector.broadcast %8 : vector<1x32xf32> to vector<8x32xf32>
    %10 = arith.addf %7, %9 : vector<8x32xf32>
    %c0_12 = arith.constant 0 : index
    %c0_13 = arith.constant 0 : index
    %11 = vector.load %arg6[%c0_12, %c0_13] : memref<32x32xf32, #tpu.memory_space<vmem>>, vector<32x32xf32>
    %cst_14 = arith.constant dense<0.000000e+00> : vector<8x32xf32>
    %12 = tpu.matmul %3, %11, %cst_14 {dimension_numbers = #tpu.dot_dimension_numbers<[1], [0], [0], [1], [0, 0, 1, 1], [], []>} : vector<8x32xf32>, vector<32x32xf32>, vector<8x32xf32> -> vector<8x32xf32>
    %c0_15 = arith.constant 0 : index
    %c0_16 = arith.constant 0 : index
    %13 = vector.load %arg10[%c0_15, %c0_16] : memref<1x32xf32, #tpu.memory_space<vmem>>, vector<1x32xf32>
    %14 = vector.broadcast %13 : vector<1x32xf32> to vector<8x32xf32>
    %15 = arith.addf %12, %14 : vector<8x32xf32>
    %c0_17 = arith.constant 0 : index
    %c0_18 = arith.constant 0 : index
    %16 = vector.load %arg7[%c0_17, %c0_18] : memref<32x32xf32, #tpu.memory_space<vmem>>, vector<32x32xf32>
    %cst_19 = arith.constant dense<0.000000e+00> : vector<8x32xf32>
    %17 = tpu.matmul %5, %16, %cst_19 {dimension_numbers = #tpu.dot_dimension_numbers<[1], [0], [0], [1], [0, 0, 1, 1], [], []>} : vector<8x32xf32>, vector<32x32xf32>, vector<8x32xf32> -> vector<8x32xf32>
    %c0_20 = arith.constant 0 : index
    %c0_21 = arith.constant 0 : index
    %18 = vector.load %arg11[%c0_20, %c0_21] : memref<1x32xf32, #tpu.memory_space<vmem>>, vector<1x32xf32>
    %19 = vector.broadcast %18 : vector<1x32xf32> to vector<8x32xf32>
    %20 = arith.addf %17, %19 : vector<8x32xf32>
    %21 = tpu.transpose %15, [1, 0] : vector<8x32xf32> -> vector<32x8xf32>
    %cst_22 = arith.constant 0.000000e+00 : f32
    %22 = vector.broadcast %cst_22 : f32 to vector<8x8xf32>
    %23 = vector.extract_strided_slice %10 {offsets = [0, 0], sizes = [8, 8], strides = [1, 1]} : vector<8x32xf32> to vector<8x8xf32>
    %24 = vector.extract_strided_slice %21 {offsets = [0, 0], sizes = [8, 8], strides = [1, 1]} : vector<32x8xf32> to vector<8x8xf32>
    %cst_23 = arith.constant dense<0.000000e+00> : vector<8x8xf32>
    %25 = tpu.matmul %23, %24, %cst_23 {dimension_numbers = #tpu.dot_dimension_numbers<[1], [0], [0], [1], [0, 0, 1, 1], [], []>} : vector<8x8xf32>, vector<8x8xf32>, vector<8x8xf32> -> vector<8x8xf32>
    %cst_24 = arith.constant dense<0xFF800000> : vector<8xf32>
    %26 = vector.multi_reduction <maximumf>, %25, %cst_24 [1] : vector<8x8xf32> to vector<8xf32>
    %27 = vector.shape_cast %26 : vector<8xf32> to vector<8x1xf32>
    %28 = vector.broadcast %27 : vector<8x1xf32> to vector<8x8xf32>
    %29 = arith.subf %25, %28 : vector<8x8xf32>
    %30 = math.exp %29 : vector<8x8xf32>
    %cst_25 = arith.constant dense<0.000000e+00> : vector<8xf32>
    %31 = vector.multi_reduction <add>, %30, %cst_25 [1] : vector<8x8xf32> to vector<8xf32>
    %32 = vector.shape_cast %31 : vector<8xf32> to vector<8x1xf32>
    %33 = tpu.reciprocal %32 {approx = true} : vector<8x1xf32> -> vector<8x1xf32>
    %34 = vector.broadcast %33 : vector<8x1xf32> to vector<8x8xf32>
    %35 = arith.mulf %30, %34 : vector<8x8xf32>
    %36 = arith.addf %22, %35 : vector<8x8xf32>
    %37 = vector.extract_strided_slice %20 {offsets = [0, 0], sizes = [8, 8], strides = [1, 1]} : vector<8x32xf32> to vector<8x8xf32>
    %cst_26 = arith.constant dense<0.000000e+00> : vector<8x8xf32>
    %38 = tpu.matmul %35, %37, %cst_26 {dimension_numbers = #tpu.dot_dimension_numbers<[1], [0], [0], [1], [0, 0, 1, 1], [], []>} : vector<8x8xf32>, vector<8x8xf32>, vector<8x8xf32> -> vector<8x8xf32>
    %c0_27 = arith.constant 0 : index
    %c0_28 = arith.constant 0 : index
    %39 = vector.load %arg15[%c0_27, %c0_28] : memref<8x32xf32, #tpu.memory_space<vmem>>, vector<8x8xf32>
    tpu.vector_store %arg15[%c0_27, %c0_28], %38 {strides = array<i32>} : memref<8x32xf32, #tpu.memory_space<vmem>>, vector<8x8xf32>,
    %40 = vector.extract_strided_slice %10 {offsets = [0, 8], sizes = [8, 8], strides = [1, 1]} : vector<8x32xf32> to vector<8x8xf32>
    %41 = vector.extract_strided_slice %21 {offsets = [8, 0], sizes = [8, 8], strides = [1, 1]} : vector<32x8xf32> to vector<8x8xf32>
    %cst_29 = arith.constant dense<0.000000e+00> : vector<8x8xf32>
    %42 = tpu.matmul %40, %41, %cst_29 {dimension_numbers = #tpu.dot_dimension_numbers<[1], [0], [0], [1], [0, 0, 1, 1], [], []>} : vector<8x8xf32>, vector<8x8xf32>, vector<8x8xf32> -> vector<8x8xf32>
    %cst_30 = arith.constant dense<0xFF800000> : vector<8xf32>
    %43 = vector.multi_reduction <maximumf>, %42, %cst_30 [1] : vector<8x8xf32> to vector<8xf32>
    %44 = vector.shape_cast %43 : vector<8xf32> to vector<8x1xf32>
    %45 = vector.broadcast %44 : vector<8x1xf32> to vector<8x8xf32>
    %46 = arith.subf %42, %45 : vector<8x8xf32>
    %47 = math.exp %46 : vector<8x8xf32>
    %cst_31 = arith.constant dense<0.000000e+00> : vector<8xf32>
    %48 = vector.multi_reduction <add>, %47, %cst_31 [1] : vector<8x8xf32> to vector<8xf32>
    %49 = vector.shape_cast %48 : vector<8xf32> to vector<8x1xf32>
    %50 = tpu.reciprocal %49 {approx = true} : vector<8x1xf32> -> vector<8x1xf32>
    %51 = vector.broadcast %50 : vector<8x1xf32> to vector<8x8xf32>
    %52 = arith.mulf %47, %51 : vector<8x8xf32>
    %53 = arith.addf %36, %52 : vector<8x8xf32>
    %54 = vector.extract_strided_slice %20 {offsets = [0, 8], sizes = [8, 8], strides = [1, 1]} : vector<8x32xf32> to vector<8x8xf32>
    %cst_32 = arith.constant dense<0.000000e+00> : vector<8x8xf32>
    %55 = tpu.matmul %52, %54, %cst_32 {dimension_numbers = #tpu.dot_dimension_numbers<[1], [0], [0], [1], [0, 0, 1, 1], [], []>} : vector<8x8xf32>, vector<8x8xf32>, vector<8x8xf32> -> vector<8x8xf32>
    %c0_33 = arith.constant 0 : index
    %c8 = arith.constant 8 : index
    %56 = vector.load %arg15[%c0_33, %c8] : memref<8x32xf32, #tpu.memory_space<vmem>>, vector<8x8xf32>
    tpu.vector_store %arg15[%c0_33, %c8], %55 {strides = array<i32>} : memref<8x32xf32, #tpu.memory_space<vmem>>, vector<8x8xf32>,
    %57 = vector.extract_strided_slice %10 {offsets = [0, 16], sizes = [8, 8], strides = [1, 1]} : vector<8x32xf32> to vector<8x8xf32>
    %58 = vector.extract_strided_slice %21 {offsets = [16, 0], sizes = [8, 8], strides = [1, 1]} : vector<32x8xf32> to vector<8x8xf32>
    %cst_34 = arith.constant dense<0.000000e+00> : vector<8x8xf32>
    %59 = tpu.matmul %57, %58, %cst_34 {dimension_numbers = #tpu.dot_dimension_numbers<[1], [0], [0], [1], [0, 0, 1, 1], [], []>} : vector<8x8xf32>, vector<8x8xf32>, vector<8x8xf32> -> vector<8x8xf32>
    %cst_35 = arith.constant dense<0xFF800000> : vector<8xf32>
    %60 = vector.multi_reduction <maximumf>, %59, %cst_35 [1] : vector<8x8xf32> to vector<8xf32>
    %61 = vector.shape_cast %60 : vector<8xf32> to vector<8x1xf32>
    %62 = vector.broadcast %61 : vector<8x1xf32> to vector<8x8xf32>
    %63 = arith.subf %59, %62 : vector<8x8xf32>
    %64 = math.exp %63 : vector<8x8xf32>
    %cst_36 = arith.constant dense<0.000000e+00> : vector<8xf32>
    %65 = vector.multi_reduction <add>, %64, %cst_36 [1] : vector<8x8xf32> to vector<8xf32>
    %66 = vector.shape_cast %65 : vector<8xf32> to vector<8x1xf32>
    %67 = tpu.reciprocal %66 {approx = true} : vector<8x1xf32> -> vector<8x1xf32>
    %68 = vector.broadcast %67 : vector<8x1xf32> to vector<8x8xf32>
    %69 = arith.mulf %64, %68 : vector<8x8xf32>
    %70 = arith.addf %53, %69 : vector<8x8xf32>
    %71 = vector.extract_strided_slice %20 {offsets = [0, 16], sizes = [8, 8], strides = [1, 1]} : vector<8x32xf32> to vector<8x8xf32>
    %cst_37 = arith.constant dense<0.000000e+00> : vector<8x8xf32>
    %72 = tpu.matmul %69, %71, %cst_37 {dimension_numbers = #tpu.dot_dimension_numbers<[1], [0], [0], [1], [0, 0, 1, 1], [], []>} : vector<8x8xf32>, vector<8x8xf32>, vector<8x8xf32> -> vector<8x8xf32>
    %c0_38 = arith.constant 0 : index
    %c16 = arith.constant 16 : index
    %73 = vector.load %arg15[%c0_38, %c16] : memref<8x32xf32, #tpu.memory_space<vmem>>, vector<8x8xf32>
    tpu.vector_store %arg15[%c0_38, %c16], %72 {strides = array<i32>} : memref<8x32xf32, #tpu.memory_space<vmem>>, vector<8x8xf32>,
    %74 = vector.extract_strided_slice %10 {offsets = [0, 24], sizes = [8, 8], strides = [1, 1]} : vector<8x32xf32> to vector<8x8xf32>
    %75 = vector.extract_strided_slice %21 {offsets = [24, 0], sizes = [8, 8], strides = [1, 1]} : vector<32x8xf32> to vector<8x8xf32>
    %cst_39 = arith.constant dense<0.000000e+00> : vector<8x8xf32>
    %76 = tpu.matmul %74, %75, %cst_39 {dimension_numbers = #tpu.dot_dimension_numbers<[1], [0], [0], [1], [0, 0, 1, 1], [], []>} : vector<8x8xf32>, vector<8x8xf32>, vector<8x8xf32> -> vector<8x8xf32>
    %cst_40 = arith.constant dense<0xFF800000> : vector<8xf32>
    %77 = vector.multi_reduction <maximumf>, %76, %cst_40 [1] : vector<8x8xf32> to vector<8xf32>
    %78 = vector.shape_cast %77 : vector<8xf32> to vector<8x1xf32>
    %79 = vector.broadcast %78 : vector<8x1xf32> to vector<8x8xf32>
    %80 = arith.subf %76, %79 : vector<8x8xf32>
    %81 = math.exp %80 : vector<8x8xf32>
    %cst_41 = arith.constant dense<0.000000e+00> : vector<8xf32>
    %82 = vector.multi_reduction <add>, %81, %cst_41 [1] : vector<8x8xf32> to vector<8xf32>
    %83 = vector.shape_cast %82 : vector<8xf32> to vector<8x1xf32>
    %84 = tpu.reciprocal %83 {approx = true} : vector<8x1xf32> -> vector<8x1xf32>
    %85 = vector.broadcast %84 : vector<8x1xf32> to vector<8x8xf32>
    %86 = arith.mulf %81, %85 : vector<8x8xf32>
    %87 = arith.addf %70, %86 : vector<8x8xf32>
    %88 = vector.extract_strided_slice %20 {offsets = [0, 24], sizes = [8, 8], strides = [1, 1]} : vector<8x32xf32> to vector<8x8xf32>
    %cst_42 = arith.constant dense<0.000000e+00> : vector<8x8xf32>
    %89 = tpu.matmul %86, %88, %cst_42 {dimension_numbers = #tpu.dot_dimension_numbers<[1], [0], [0], [1], [0, 0, 1, 1], [], []>} : vector<8x8xf32>, vector<8x8xf32>, vector<8x8xf32> -> vector<8x8xf32>
    %c0_43 = arith.constant 0 : index
    %c24 = arith.constant 24 : index
    %90 = vector.load %arg15[%c0_43, %c24] : memref<8x32xf32, #tpu.memory_space<vmem>>, vector<8x8xf32>
    tpu.vector_store %arg15[%c0_43, %c24], %89 {strides = array<i32>} : memref<8x32xf32, #tpu.memory_space<vmem>>, vector<8x8xf32>,
    %cst_44 = arith.constant 2.500000e-01 : f32
    %91 = vector.broadcast %cst_44 : f32 to vector<8x8xf32>
    %92 = arith.mulf %87, %91 : vector<8x8xf32>
    %c0_45 = arith.constant 0 : index
    %c0_46 = arith.constant 0 : index
    %c0_47 = arith.constant 0 : index
    %93 = vector.load %arg14[%c0_45, %c0_46, %c0_47] : memref<1x8x8xf32, #tpu.memory_space<vmem>>, vector<1x8x8xf32>
    %94 = vector.shape_cast %93 : vector<1x8x8xf32> to vector<8x8xf32>
    %95 = vector.shape_cast %92 : vector<8x8xf32> to vector<1x8x8xf32>
    tpu.vector_store %arg14[%c0_45, %c0_46, %c0_47], %95 {strides = array<i32>} : memref<1x8x8xf32, #tpu.memory_space<vmem>>, vector<1x8x8xf32>,
    %c0_48 = arith.constant 0 : index
    %c0_49 = arith.constant 0 : index
    %96 = vector.load %arg15[%c0_48, %c0_49] : memref<8x32xf32, #tpu.memory_space<vmem>>, vector<8x32xf32>
    %c0_50 = arith.constant 0 : index
    %c0_51 = arith.constant 0 : index
    %97 = vector.load %arg8[%c0_50, %c0_51] : memref<32x32xf32, #tpu.memory_space<vmem>>, vector<32x32xf32>
    %cst_52 = arith.constant dense<0.000000e+00> : vector<8x32xf32>
    %98 = tpu.matmul %96, %97, %cst_52 {dimension_numbers = #tpu.dot_dimension_numbers<[1], [0], [0], [1], [0, 0, 1, 1], [], []>} : vector<8x32xf32>, vector<32x32xf32>, vector<8x32xf32> -> vector<8x32xf32>
    %c0_53 = arith.constant 0 : index
    %c0_54 = arith.constant 0 : index
    %99 = vector.load %arg12[%c0_53, %c0_54] : memref<1x32xf32, #tpu.memory_space<vmem>>, vector<1x32xf32>
    %100 = vector.broadcast %99 : vector<1x32xf32> to vector<8x32xf32>
    %101 = arith.addf %98, %100 : vector<8x32xf32>
    %102 = vector.shape_cast %101 : vector<8x32xf32> to vector<1x8x32xf32>
    %c0_55 = arith.constant 0 : index
    %c0_56 = arith.constant 0 : index
    %c0_57 = arith.constant 0 : index
    %103 = vector.load %arg13[%c0_55, %c0_56, %c0_57] : memref<1x8x32xf32, #tpu.memory_space<vmem>>, vector<1x8x32xf32>
    tpu.vector_store %arg13[%c0_55, %c0_56, %c0_57], %102 {strides = array<i32>} : memref<1x8x32xf32, #tpu.memory_space<vmem>>, vector<1x8x32xf32>,
    return
  }
  func.func @transform_0(%arg0: i32, %arg1: i32) -> (i32, i32, i32) {
    %c0_i32 = arith.constant 0 : i32
    %c0_i32_0 = arith.constant 0 : i32
    return %arg0, %arg1, %c0_i32 : i32, i32, i32
  }
  func.func @transform_1(%arg0: i32, %arg1: i32) -> (i32, i32, i32) {
    %c0_i32 = arith.constant 0 : i32
    %c0_i32_0 = arith.constant 0 : i32
    %c0_i32_1 = arith.constant 0 : i32
    return %arg0, %c0_i32, %c0_i32_0 : i32, i32, i32
  }
  func.func @transform_2(%arg0: i32, %arg1: i32) -> (i32, i32, i32) {
    %c0_i32 = arith.constant 0 : i32
    %c0_i32_0 = arith.constant 0 : i32
    %c0_i32_1 = arith.constant 0 : i32
    return %arg0, %c0_i32, %c0_i32_0 : i32, i32, i32
  }
  func.func @transform_3(%arg0: i32, %arg1: i32) -> (i32, i32) {
    %c0_i32 = arith.constant 0 : i32
    %c0_i32_0 = arith.constant 0 : i32
    %c0_i32_1 = arith.constant 0 : i32
    return %c0_i32, %c0_i32_0 : i32, i32
  }
  func.func @transform_4(%arg0: i32, %arg1: i32) -> (i32, i32) {
    %c0_i32 = arith.constant 0 : i32
    %c0_i32_0 = arith.constant 0 : i32
    %c0_i32_1 = arith.constant 0 : i32
    return %c0_i32, %c0_i32_0 : i32, i32
  }
  func.func @transform_5(%arg0: i32, %arg1: i32) -> (i32, i32) {
    %c0_i32 = arith.constant 0 : i32
    %c0_i32_0 = arith.constant 0 : i32
    %c0_i32_1 = arith.constant 0 : i32
    return %c0_i32, %c0_i32_0 : i32, i32
  }
  func.func @transform_6(%arg0: i32, %arg1: i32) -> (i32, i32) {
    %c0_i32 = arith.constant 0 : i32
    %c0_i32_0 = arith.constant 0 : i32
    %c0_i32_1 = arith.constant 0 : i32
    return %c0_i32, %c0_i32_0 : i32, i32
  }
  func.func @transform_7(%arg0: i32, %arg1: i32) -> (i32, i32) {
    %c0_i32 = arith.constant 0 : i32
    %c0_i32_0 = arith.constant 0 : i32
    %c0_i32_1 = arith.constant 0 : i32
    return %c0_i32, %c0_i32_0 : i32, i32
  }
  func.func @transform_8(%arg0: i32, %arg1: i32) -> (i32, i32) {
    %c0_i32 = arith.constant 0 : i32
    %c0_i32_0 = arith.constant 0 : i32
    %c0_i32_1 = arith.constant 0 : i32
    return %c0_i32, %c0_i32_0 : i32, i32
  }
  func.func @transform_9(%arg0: i32, %arg1: i32) -> (i32, i32) {
    %c0_i32 = arith.constant 0 : i32
    %c0_i32_0 = arith.constant 0 : i32
    %c0_i32_1 = arith.constant 0 : i32
    return %c0_i32, %c0_i32_0 : i32, i32
  }
  func.func @transform_10(%arg0: i32, %arg1: i32) -> (i32, i32) {
    %c0_i32 = arith.constant 0 : i32
    %c0_i32_0 = arith.constant 0 : i32
    %c0_i32_1 = arith.constant 0 : i32
    return %c0_i32, %c0_i32_0 : i32, i32
  }
  func.func @transform_11(%arg0: i32, %arg1: i32) -> (i32, i32, i32) {
    %c0_i32 = arith.constant 0 : i32
    %c0_i32_0 = arith.constant 0 : i32
    return %arg0, %arg1, %c0_i32 : i32, i32, i32
  }
  func.func @transform_12(%arg0: i32, %arg1: i32) -> (i32, i32, i32) {
    %c0_i32 = arith.constant 0 : i32
    %c0_i32_0 = arith.constant 0 : i32
    return %arg0, %arg1, %c0_i32 : i32, i32, i32
  }
}

</mosaic_0001>

<llo_original>
// kernel: custom_mha_forward.1
$region0: #{custom_mha_forward.1}
  #allocation0 [shape = 'u32[]', space=smem, size = 0x4, offset = 0x4, fixed_abs, tag = 'smem constant byte address 0x4 - core index']
  #allocation1 [shape = 'u32[72,128]{1,0:T(1,128)}', space=vmem, size = 0x9000, scoped, tag = 'internal scratch']
  #allocation2 [shape = 'f32[8,32]{1,0:T(8,128)}', space=vmem, size = 0x1000, scoped, tag = 'scratch operand']
  %s0 = inlined_call_operand.vmem [shape: f32[2,8,32], index: 0, kind: input, shape index: {}]
  %s1 = inlined_call_operand.vmem [shape: f32[2,8,32], index: 1, kind: input, shape index: {}]
  %s2 = inlined_call_operand.vmem [shape: f32[2,8,32], index: 2, kind: input, shape index: {}]
  %s3 = inlined_call_operand.vmem [shape: f32[32,32], index: 3, kind: input, shape index: {}]
  %s4 = inlined_call_operand.vmem [shape: f32[32,32], index: 4, kind: input, shape index: {}]
  %s5 = inlined_call_operand.vmem [shape: f32[32,32], index: 5, kind: input, shape index: {}]
  %s6 = inlined_call_operand.vmem [shape: f32[32,32], index: 6, kind: input, shape index: {}]
  %s7 = inlined_call_operand.vmem [shape: f32[1,32], index: 7, kind: input, shape index: {}]
  %s8 = inlined_call_operand.vmem [shape: f32[1,32], index: 8, kind: input, shape index: {}]
  %s9 = inlined_call_operand.vmem [shape: f32[1,32], index: 9, kind: input, shape index: {}]
  %s10 = inlined_call_operand.vmem [shape: f32[1,32], index: 10, kind: input, shape index: {}]
  %s11 = inlined_call_operand.vmem [shape: f32[2,8,32], index: 11, kind: output, shape index: {0}]
  %s12 = inlined_call_operand.hbm [shape: f32[2,8,8], index: 12, kind: output, shape index: {1}]
  %13 = xla_tuple %s11, %s12
  %s14 = sld [smem:[#allocation0]]
  $region85: #{custom_mha_forward.1} parent=0
    _
  %s16 = ssub.s32 1, %s14
  %s17 = scalar_select 0, %s16, %s14
  $region1: #{custom_mha_forward.1} parent=0
    #allocation3 [shape = 'u8[8192]{0}', space=vmem, size = 0x2000, scoped, tag = 'output window, operand 1']
    #allocation4 [shape = 's32[2]{0}', space=sflag, size = 0x8, scoped, tag = 'scoped memory for custom_mha_forward.1']
    %18 = vsyncpa [#allocation4], 0
    %s19 = scalar_lea.sflag [#allocation4], 1
    %20 = vsyncpa %s19, 0
    loop: start=0, step=1, limit=4
    $region2: #{custom_mha_forward.1} parent=1 // loop_pre_header
      _
    $region3: #{custom_mha_forward.1} parent=1 // loop_header
      %s22 = sphi 0, %s26
      %p23 = scmp.ge.s32.totalorder %s22, 4
      %s29 = sphi 0, %s41
      %s30 = sphi 0, %s37
      %s31 = sphi 0, %s29
      %s32 = sphi 0, %s30
      %s33 = sphi 0, %s31
      %s34 = sphi 0, %s32
      %s46 = sphi 0, %s48
      %s49 = sphi 0, %s46
      %s50 = sphi 0, %s49
      %s66 = sphi 0, %s50
      %s72 = sphi 0, %s74
      %s75 = sphi 0, %s72
      %s76 = sphi 0, %s75
      %s92 = sphi 0, %s76
      %s98 = sphi 0, %s100
      %s101 = sphi 0, %s98
      %s102 = sphi 0, %s101
      %s118 = sphi 0, %s102
      %s122 = sphi 0, %s122
      %s124 = sphi 0, %s122
      %s125 = sphi 0, %s124
      %s139 = sphi 0, %s125
      %s143 = sphi 0, %s143
      %s145 = sphi 0, %s143
      %s146 = sphi 0, %s145
      %s160 = sphi 0, %s146
      %s164 = sphi 0, %s164
      %s166 = sphi 0, %s164
      %s167 = sphi 0, %s166
      %s181 = sphi 0, %s167
      %s185 = sphi 0, %s185
      %s187 = sphi 0, %s185
      %s188 = sphi 0, %s187
      %s202 = sphi 0, %s188
      %s206 = sphi 0, %s206
      %s208 = sphi 0, %s206
      %s209 = sphi 0, %s208
      %s223 = sphi 0, %s209
      %s227 = sphi 0, %s227
      %s229 = sphi 0, %s227
      %s230 = sphi 0, %s229
      %s244 = sphi 0, %s230
      %s248 = sphi 0, %s248
      %s250 = sphi 0, %s248
      %s251 = sphi 0, %s250
      %s265 = sphi 0, %s251
      %s269 = sphi 0, %s269
      %s271 = sphi 0, %s269
      %s272 = sphi 0, %s271
      %s286 = sphi 0, %s272
      %s294 = sphi 0, %s296
      %s297 = sphi 0, %s294
      %s298 = sphi 0, %s297
      %s314 = sphi 0, %s298
      %s322 = sphi 0, %s324
      %s325 = sphi 0, %s322
      %s326 = sphi 0, %s325
      %s342 = sphi 0, %s326
    $region4: #{custom_mha_forward.1} parent=1 // loop_header_branch
      %25 = sbr.rel (%p23) target = $region8
    $region5: #{custom_mha_forward.1} parent=1 // loop_body
      %s27 = ssub.s32 %s22, 1
      %s28 = ssub.s32 %s22, 2
      %s35 = sadd.s32 1, %s30
      %p36 = scmp.ge.s32.totalorder %s35, 1
      %s37 = scalar_select %p36, 0, %s35
      %s38 = sadd.s32 1, %s29
      %s39 = scalar_select %p36, %s38, %s29
      %p40 = scmp.ge.s32.totalorder %s39, 2
      %s41 = scalar_select %p40, 0, %s39
      %s42 = ssub.s32 %s29, %s41
      %s43 = ssub.s32 %s30, %s37
      %s44 = sor.u32 %s42, %s43
      %p45 = scmp.eq.s32.totalorder %s44, 0
      %s47 = sadd.s32 %s46, 1
      %s48 = scalar_select %p45, %s46, %s47
      %p51 = pneg %p45
      %p52 = scmp.eq.s32.totalorder %s22, 1
      %p53 = por %p51, %p52
      %p54 = scmp.ne.s32.totalorder %s46, %s49
      %p55 = scmp.eq.s32.totalorder %s22, 0
      %p56 = por %p54, %p55
      %p57 = scmp.ne.s32.totalorder %s46, %s49
      %p58 = scmp.eq.s32.totalorder %s27, 1
      %p59 = por %p57, %p58
      %p60 = scmp.ne.s32.totalorder %s49, %s50
      %p61 = scmp.eq.s32.totalorder %s27, 0
      %p62 = por %p60, %p61
      %p63 = scmp.ne.s32.totalorder %s49, %s50
      %p64 = scmp.eq.s32.totalorder %s28, 1
      %p65 = por %p63, %p64
      %p67 = scmp.ne.s32.totalorder %s50, %s66
      %p68 = scmp.eq.s32.totalorder %s28, 0
      %p69 = por %p67, %p68
      %s70 = ssub.s32 %s29, %s41
      %p71 = scmp.eq.s32.totalorder %s70, 0
      %s73 = sadd.s32 %s72, 1
      %s74 = scalar_select %p71, %s72, %s73
      %p77 = pneg %p71
      %p78 = scmp.eq.s32.totalorder %s22, 1
      %p79 = por %p77, %p78
      %p80 = scmp.ne.s32.totalorder %s72, %s75
      %p81 = scmp.eq.s32.totalorder %s22, 0
      %p82 = por %p80, %p81
      %p83 = scmp.ne.s32.totalorder %s72, %s75
      %p84 = scmp.eq.s32.totalorder %s27, 1
      %p85 = por %p83, %p84
      %p86 = scmp.ne.s32.totalorder %s75, %s76
      %p87 = scmp.eq.s32.totalorder %s27, 0
      %p88 = por %p86, %p87
      %p89 = scmp.ne.s32.totalorder %s75, %s76
      %p90 = scmp.eq.s32.totalorder %s28, 1
      %p91 = por %p89, %p90
      %p93 = scmp.ne.s32.totalorder %s76, %s92
      %p94 = scmp.eq.s32.totalorder %s28, 0
      %p95 = por %p93, %p94
      %s96 = ssub.s32 %s29, %s41
      %p97 = scmp.eq.s32.totalorder %s96, 0
      %s99 = sadd.s32 %s98, 1
      %s100 = scalar_select %p97, %s98, %s99
      %p103 = pneg %p97
      %p104 = scmp.eq.s32.totalorder %s22, 1
      %p105 = por %p103, %p104
      %p106 = scmp.ne.s32.totalorder %s98, %s101
      %p107 = scmp.eq.s32.totalorder %s22, 0
      %p108 = por %p106, %p107
      %p109 = scmp.ne.s32.totalorder %s98, %s101
      %p110 = scmp.eq.s32.totalorder %s27, 1
      %p111 = por %p109, %p110
      %p112 = scmp.ne.s32.totalorder %s101, %s102
      %p113 = scmp.eq.s32.totalorder %s27, 0
      %p114 = por %p112, %p113
      %p115 = scmp.ne.s32.totalorder %s101, %s102
      %p116 = scmp.eq.s32.totalorder %s28, 1
      %p117 = por %p115, %p116
      %p119 = scmp.ne.s32.totalorder %s102, %s118
      %p120 = scmp.eq.s32.totalorder %s28, 0
      %p121 = por %p119, %p120
      %s123 = sadd.s32 %s122, 1
      %p126 = scmp.eq.s32.totalorder %s22, 1
      %p127 = scmp.ne.s32.totalorder %s122, %s124
      %p128 = scmp.eq.s32.totalorder %s22, 0
      %p129 = por %p127, %p128
      %p130 = scmp.ne.s32.totalorder %s122, %s124
      %p131 = scmp.eq.s32.totalorder %s27, 1
      %p132 = por %p130, %p131
      %p133 = scmp.ne.s32.totalorder %s124, %s125
      %p134 = scmp.eq.s32.totalorder %s27, 0
      %p135 = por %p133, %p134
      %p136 = scmp.ne.s32.totalorder %s124, %s125
      %p137 = scmp.eq.s32.totalorder %s28, 1
      %p138 = por %p136, %p137
      %p140 = scmp.ne.s32.totalorder %s125, %s139
      %p141 = scmp.eq.s32.totalorder %s28, 0
      %p142 = por %p140, %p141
      %s144 = sadd.s32 %s143, 1
      %p147 = scmp.eq.s32.totalorder %s22, 1
      %p148 = scmp.ne.s32.totalorder %s143, %s145
      %p149 = scmp.eq.s32.totalorder %s22, 0
      %p150 = por %p148, %p149
      %p151 = scmp.ne.s32.totalorder %s143, %s145
      %p152 = scmp.eq.s32.totalorder %s27, 1
      %p153 = por %p151, %p152
      %p154 = scmp.ne.s32.totalorder %s145, %s146
      %p155 = scmp.eq.s32.totalorder %s27, 0
      %p156 = por %p154, %p155
      %p157 = scmp.ne.s32.totalorder %s145, %s146
      %p158 = scmp.eq.s32.totalorder %s28, 1
      %p159 = por %p157, %p158
      %p161 = scmp.ne.s32.totalorder %s146, %s160
      %p162 = scmp.eq.s32.totalorder %s28, 0
      %p163 = por %p161, %p162
      %s165 = sadd.s32 %s164, 1
      %p168 = scmp.eq.s32.totalorder %s22, 1
      %p169 = scmp.ne.s32.totalorder %s164, %s166
      %p170 = scmp.eq.s32.totalorder %s22, 0
      %p171 = por %p169, %p170
      %p172 = scmp.ne.s32.totalorder %s164, %s166
      %p173 = scmp.eq.s32.totalorder %s27, 1
      %p174 = por %p172, %p173
      %p175 = scmp.ne.s32.totalorder %s166, %s167
      %p176 = scmp.eq.s32.totalorder %s27, 0
      %p177 = por %p175, %p176
      %p178 = scmp.ne.s32.totalorder %s166, %s167
      %p179 = scmp.eq.s32.totalorder %s28, 1
      %p180 = por %p178, %p179
      %p182 = scmp.ne.s32.totalorder %s167, %s181
      %p183 = scmp.eq.s32.totalorder %s28, 0
      %p184 = por %p182, %p183
      %s186 = sadd.s32 %s185, 1
      %p189 = scmp.eq.s32.totalorder %s22, 1
      %p190 = scmp.ne.s32.totalorder %s185, %s187
      %p191 = scmp.eq.s32.totalorder %s22, 0
      %p192 = por %p190, %p191
      %p193 = scmp.ne.s32.totalorder %s185, %s187
      %p194 = scmp.eq.s32.totalorder %s27, 1
      %p195 = por %p193, %p194
      %p196 = scmp.ne.s32.totalorder %s187, %s188
      %p197 = scmp.eq.s32.totalorder %s27, 0
      %p198 = por %p196, %p197
      %p199 = scmp.ne.s32.totalorder %s187, %s188
      %p200 = scmp.eq.s32.totalorder %s28, 1
      %p201 = por %p199, %p200
      %p203 = scmp.ne.s32.totalorder %s188, %s202
      %p204 = scmp.eq.s32.totalorder %s28, 0
      %p205 = por %p203, %p204
      %s207 = sadd.s32 %s206, 1
      %p210 = scmp.eq.s32.totalorder %s22, 1
      %p211 = scmp.ne.s32.totalorder %s206, %s208
      %p212 = scmp.eq.s32.totalorder %s22, 0
      %p213 = por %p211, %p212
      %p214 = scmp.ne.s32.totalorder %s206, %s208
      %p215 = scmp.eq.s32.totalorder %s27, 1
      %p216 = por %p214, %p215
      %p217 = scmp.ne.s32.totalorder %s208, %s209
      %p218 = scmp.eq.s32.totalorder %s27, 0
      %p219 = por %p217, %p218
      %p220 = scmp.ne.s32.totalorder %s208, %s209
      %p221 = scmp.eq.s32.totalorder %s28, 1
      %p222 = por %p220, %p221
      %p224 = scmp.ne.s32.totalorder %s209, %s223
      %p225 = scmp.eq.s32.totalorder %s28, 0
      %p226 = por %p224, %p225
      %s228 = sadd.s32 %s227, 1
      %p231 = scmp.eq.s32.totalorder %s22, 1
      %p232 = scmp.ne.s32.totalorder %s227, %s229
      %p233 = scmp.eq.s32.totalorder %s22, 0
      %p234 = por %p232, %p233
      %p235 = scmp.ne.s32.totalorder %s227, %s229
      %p236 = scmp.eq.s32.totalorder %s27, 1
      %p237 = por %p235, %p236
      %p238 = scmp.ne.s32.totalorder %s229, %s230
      %p239 = scmp.eq.s32.totalorder %s27, 0
      %p240 = por %p238, %p239
      %p241 = scmp.ne.s32.totalorder %s229, %s230
      %p242 = scmp.eq.s32.totalorder %s28, 1
      %p243 = por %p241, %p242
      %p245 = scmp.ne.s32.totalorder %s230, %s244
      %p246 = scmp.eq.s32.totalorder %s28, 0
      %p247 = por %p245, %p246
      %s249 = sadd.s32 %s248, 1
      %p252 = scmp.eq.s32.totalorder %s22, 1
      %p253 = scmp.ne.s32.totalorder %s248, %s250
      %p254 = scmp.eq.s32.totalorder %s22, 0
      %p255 = por %p253, %p254
      %p256 = scmp.ne.s32.totalorder %s248, %s250
      %p257 = scmp.eq.s32.totalorder %s27, 1
      %p258 = por %p256, %p257
      %p259 = scmp.ne.s32.totalorder %s250, %s251
      %p260 = scmp.eq.s32.totalorder %s27, 0
      %p261 = por %p259, %p260
      %p262 = scmp.ne.s32.totalorder %s250, %s251
      %p263 = scmp.eq.s32.totalorder %s28, 1
      %p264 = por %p262, %p263
      %p266 = scmp.ne.s32.totalorder %s251, %s265
      %p267 = scmp.eq.s32.totalorder %s28, 0
      %p268 = por %p266, %p267
      %s270 = sadd.s32 %s269, 1
      %p273 = scmp.eq.s32.totalorder %s22, 1
      %p274 = scmp.ne.s32.totalorder %s269, %s271
      %p275 = scmp.eq.s32.totalorder %s22, 0
      %p276 = por %p274, %p275
      %p277 = scmp.ne.s32.totalorder %s269, %s271
      %p278 = scmp.eq.s32.totalorder %s27, 1
      %p279 = por %p277, %p278
      %p280 = scmp.ne.s32.totalorder %s271, %s272
      %p281 = scmp.eq.s32.totalorder %s27, 0
      %p282 = por %p280, %p281
      %p283 = scmp.ne.s32.totalorder %s271, %s272
      %p284 = scmp.eq.s32.totalorder %s28, 1
      %p285 = por %p283, %p284
      %p287 = scmp.ne.s32.totalorder %s272, %s286
      %p288 = scmp.eq.s32.totalorder %s28, 0
      %p289 = por %p287, %p288
      %s290 = ssub.s32 %s29, %s41
      %s291 = ssub.s32 %s30, %s37
      %s292 = sor.u32 %s290, %s291
      %p293 = scmp.eq.s32.totalorder %s292, 0
      %s295 = sadd.s32 %s294, 1
      %s296 = scalar_select %p293, %s294, %s295
      %p299 = pneg %p293
      %p300 = scmp.eq.s32.totalorder %s22, 1
      %p301 = por %p299, %p300
      %p302 = scmp.ne.s32.totalorder %s294, %s297
      %p303 = scmp.eq.s32.totalorder %s22, 0
      %p304 = por %p302, %p303
      %p305 = scmp.ne.s32.totalorder %s294, %s297
      %p306 = scmp.eq.s32.totalorder %s27, 1
      %p307 = por %p305, %p306
      %p308 = scmp.ne.s32.totalorder %s297, %s298
      %p309 = scmp.eq.s32.totalorder %s27, 0
      %p310 = por %p308, %p309
      %p311 = scmp.ne.s32.totalorder %s297, %s298
      %p312 = scmp.eq.s32.totalorder %s28, 1
      %p313 = por %p311, %p312
      %p315 = scmp.ne.s32.totalorder %s298, %s314
      %p316 = scmp.eq.s32.totalorder %s28, 0
      %p317 = por %p315, %p316
      %s318 = ssub.s32 %s29, %s41
      %s319 = ssub.s32 %s30, %s37
      %s320 = sor.u32 %s318, %s319
      %p321 = scmp.eq.s32.totalorder %s320, 0
      %s323 = sadd.s32 %s322, 1
      %s324 = scalar_select %p321, %s322, %s323
      %p327 = pneg %p321
      %p328 = scmp.eq.s32.totalorder %s22, 1
      %p329 = por %p327, %p328
      %p330 = scmp.ne.s32.totalorder %s322, %s325
      %p331 = scmp.eq.s32.totalorder %s22, 0
      %p332 = por %p330, %p331
      %p333 = scmp.ne.s32.totalorder %s322, %s325
      %p334 = scmp.eq.s32.totalorder %s27, 1
      %p335 = por %p333, %p334
      %p336 = scmp.ne.s32.totalorder %s325, %s326
      %p337 = scmp.eq.s32.totalorder %s27, 0
      %p338 = por %p336, %p337
      %p339 = scmp.ne.s32.totalorder %s325, %s326
      %p340 = scmp.eq.s32.totalorder %s28, 1
      %p341 = por %p339, %p340
      %p343 = scmp.ne.s32.totalorder %s326, %s342
      %p344 = scmp.eq.s32.totalorder %s28, 0
      %p345 = por %p343, %p344
      %p346 = scmp.le.s32.totalorder 1, %s22
      %p347 = scmp.lt.s32.totalorder %s22, 3
      %p348 = pnand %p346, %p347
      %p349 = pneg %p348
      // Predicated region
      $region9: #{custom_mha_forward.1} parent=5 // pred_check
        _
      $region10: #{custom_mha_forward.1} parent=5 // pred_check_branch
        %351 = sbr.rel (%p348) target = $region12
      $region11: #{custom_mha_forward.1} parent=5 // pred_region
        %s352 = ssub.s32 %s22, 1
        // Predicated region
        $region13: #{custom_mha_forward.1} parent=11 // pred_check
          %p353 = pneg %p135
        $region14: #{custom_mha_forward.1} parent=11 // pred_check_branch
          %355 = sbr.rel (%p353) target = $region16
        $region15: #{custom_mha_forward.1} parent=11 // pred_region
          _
        $region16: #{custom_mha_forward.1} parent=11 // pred_fallthru
          _
        // Predicated region
        $region17: #{custom_mha_forward.1} parent=11 // pred_check
          %p356 = pneg %p156
        $region18: #{custom_mha_forward.1} parent=11 // pred_check_branch
          %358 = sbr.rel (%p356) target = $region20
        $region19: #{custom_mha_forward.1} parent=11 // pred_region
          _
        $region20: #{custom_mha_forward.1} parent=11 // pred_fallthru
          _
        // Predicated region
        $region21: #{custom_mha_forward.1} parent=11 // pred_check
          %p359 = pneg %p177
        $region22: #{custom_mha_forward.1} parent=11 // pred_check_branch
          %361 = sbr.rel (%p359) target = $region24
        $region23: #{custom_mha_forward.1} parent=11 // pred_region
          _
        $region24: #{custom_mha_forward.1} parent=11 // pred_fallthru
          _
        // Predicated region
        $region25: #{custom_mha_forward.1} parent=11 // pred_check
          %p362 = pneg %p198
        $region26: #{custom_mha_forward.1} parent=11 // pred_check_branch
          %364 = sbr.rel (%p362) target = $region28
        $region27: #{custom_mha_forward.1} parent=11 // pred_region
          _
        $region28: #{custom_mha_forward.1} parent=11 // pred_fallthru
          _
        // Predicated region
        $region29: #{custom_mha_forward.1} parent=11 // pred_check
          %p365 = pneg %p219
        $region30: #{custom_mha_forward.1} parent=11 // pred_check_branch
          %367 = sbr.rel (%p365) target = $region32
        $region31: #{custom_mha_forward.1} parent=11 // pred_region
          _
        $region32: #{custom_mha_forward.1} parent=11 // pred_fallthru
          _
        // Predicated region
        $region33: #{custom_mha_forward.1} parent=11 // pred_check
          %p368 = pneg %p240
        $region34: #{custom_mha_forward.1} parent=11 // pred_check_branch
          %370 = sbr.rel (%p368) target = $region36
        $region35: #{custom_mha_forward.1} parent=11 // pred_region
          _
        $region36: #{custom_mha_forward.1} parent=11 // pred_fallthru
          _
        // Predicated region
        $region37: #{custom_mha_forward.1} parent=11 // pred_check
          %p371 = pneg %p261
        $region38: #{custom_mha_forward.1} parent=11 // pred_check_branch
          %373 = sbr.rel (%p371) target = $region40
        $region39: #{custom_mha_forward.1} parent=11 // pred_region
          _
        $region40: #{custom_mha_forward.1} parent=11 // pred_fallthru
          _
        // Predicated region
        $region41: #{custom_mha_forward.1} parent=11 // pred_check
          %p374 = pneg %p282
        $region42: #{custom_mha_forward.1} parent=11 // pred_check_branch
          %376 = sbr.rel (%p374) target = $region44
        $region43: #{custom_mha_forward.1} parent=11 // pred_region
          _
        $region44: #{custom_mha_forward.1} parent=11 // pred_fallthru
          _
      $region12: #{custom_mha_forward.1} parent=5 // pred_fallthru
        _
      %p377 = scmp.lt.s32.totalorder %s22, 2
      // Predicated region
      $region45: #{custom_mha_forward.1} parent=5 // pred_check
        %p378 = pneg %p377
      $region46: #{custom_mha_forward.1} parent=5 // pred_check_branch
        %380 = sbr.rel (%p378) target = $region48
      $region47: #{custom_mha_forward.1} parent=5 // pred_region
        // Predicated region
        $region49: #{custom_mha_forward.1} parent=47 // pred_check
          %p381 = pneg %p56
        $region50: #{custom_mha_forward.1} parent=47 // pred_check_branch
          %383 = sbr.rel (%p381) target = $region52
        $region51: #{custom_mha_forward.1} parent=47 // pred_region
          %p384 = scmp.lt.s32.totalorder %s29, 1
          %s385 = scalar_select %p384, %s29, 1
          %p386 = scmp.lt.s32.totalorder %s30, 0
          %s387 = scalar_select %p386, %s30, 0
          %s388 = sadd.s32 %s387, %s385
          %s389 = smul.addr %s388, 8
          %s390 = scalar_lea.vmem %s0, %s389
        $region52: #{custom_mha_forward.1} parent=47 // pred_fallthru
          _
        // Predicated region
        $region53: #{custom_mha_forward.1} parent=47 // pred_check
          %p391 = pneg %p82
        $region54: #{custom_mha_forward.1} parent=47 // pred_check_branch
          %393 = sbr.rel (%p391) target = $region56
        $region55: #{custom_mha_forward.1} parent=47 // pred_region
          %p394 = scmp.lt.s32.totalorder %s29, 1
          %s395 = scalar_select %p394, %s29, 1
          %s396 = smul.addr %s395, 8
          %s397 = scalar_lea.vmem %s1, %s396
        $region56: #{custom_mha_forward.1} parent=47 // pred_fallthru
          _
        // Predicated region
        $region57: #{custom_mha_forward.1} parent=47 // pred_check
          %p398 = pneg %p108
        $region58: #{custom_mha_forward.1} parent=47 // pred_check_branch
          %400 = sbr.rel (%p398) target = $region60
        $region59: #{custom_mha_forward.1} parent=47 // pred_region
          %p401 = scmp.lt.s32.totalorder %s29, 1
          %s402 = scalar_select %p401, %s29, 1
          %s403 = smul.addr %s402, 8
          %s404 = scalar_lea.vmem %s2, %s403
        $region60: #{custom_mha_forward.1} parent=47 // pred_fallthru
          _
      $region48: #{custom_mha_forward.1} parent=5 // pred_fallthru
        _
      %p405 = scmp.le.s32.totalorder 1, %s22
      %p406 = scmp.lt.s32.totalorder %s22, 3
      %p407 = pnand %p405, %p406
      %p408 = pneg %p407
      // Predicated region
      $region61: #{custom_mha_forward.1} parent=5 // pred_check
        _
      $region62: #{custom_mha_forward.1} parent=5 // pred_check_branch
        %410 = sbr.rel (%p407) target = $region64
      $region63: #{custom_mha_forward.1} parent=5 // pred_region
        %s411 = ssub.s32 %s22, 1
        %p412 = scmp.lt.s32.totalorder %s31, 1
        %s413 = scalar_select %p412, %s31, 1
        %p414 = scmp.lt.s32.totalorder %s32, 0
        %s415 = scalar_select %p414, %s32, 0
        %s416 = sadd.s32 %s415, %s413
        %s417 = smul.addr %s416, 8
        %s418 = scalar_lea.vmem %s0, %s417
        %p419 = pneg %p62
        %p420 = pneg %p59
        %p421 = scmp.lt.s32.totalorder %s31, 1
        %s422 = scalar_select %p421, %s31, 1
        %s423 = smul.addr %s422, 8
        %s424 = scalar_lea.vmem %s1, %s423
        %p425 = pneg %p88
        %p426 = pneg %p85
        %p427 = scmp.lt.s32.totalorder %s31, 1
        %s428 = scalar_select %p427, %s31, 1
        %s429 = smul.addr %s428, 8
        %s430 = scalar_lea.vmem %s2, %s429
        %p431 = pneg %p114
        %p432 = pneg %p111
        %p433 = pneg %p135
        %p434 = pneg %p132
        %p435 = pneg %p156
        %p436 = pneg %p153
        %p437 = pneg %p177
        %p438 = pneg %p174
        %p439 = pneg %p198
        %p440 = pneg %p195
        %p441 = pneg %p219
        %p442 = pneg %p216
        %p443 = pneg %p240
        %p444 = pneg %p237
        %p445 = pneg %p261
        %p446 = pneg %p258
        %p447 = pneg %p282
        %p448 = pneg %p279
        %p449 = pneg %p310
        %p450 = pneg %p307
        %p451 = scmp.lt.s32.totalorder %s31, 1
        %s452 = scalar_select %p451, %s31, 1
        %p453 = scmp.lt.s32.totalorder %s32, 0
        %s454 = scalar_select %p453, %s32, 0
        %s455 = sadd.s32 %s454, %s452
        %s456 = smul.addr %s455, 8
        %s457 = scalar_lea.vmem %s11, %s456
        %p458 = pneg %p338
        %p459 = pneg %p335
        %s460 = sand.u32 %s325, 1
        %s461 = scalar_lea.sflag [#allocation4], %s460
        %s462 = sand.u32 %s325, 1
        %s463 = smul.addr %s462, 8
        %s464 = scalar_lea.vmem [#allocation3], %s463
        %p465 = scmp.lt.s32.totalorder %s31, 1
        %s466 = scalar_select %p465, %s31, 1
        %p467 = scmp.lt.s32.totalorder %s32, 0
        %s468 = scalar_select %p467, %s32, 0
        %s469 = sadd.s32 %s468, %s466
        %s470 = smul.addr %s469, 8
        %s471 = scalar_lea.vmem %s0, %s470
        %p472 = scmp.lt.s32.totalorder %s31, 1
        %s473 = scalar_select %p472, %s31, 1
        %s474 = smul.addr %s473, 8
        %s475 = scalar_lea.vmem %s1, %s474
        %p476 = scmp.lt.s32.totalorder %s31, 1
        %s477 = scalar_select %p476, %s31, 1
        %s478 = smul.addr %s477, 8
        %s479 = scalar_lea.vmem %s2, %s478
        %p480 = scmp.lt.s32.totalorder %s31, 1
        %s481 = scalar_select %p480, %s31, 1
        %p482 = scmp.lt.s32.totalorder %s32, 0
        %s483 = scalar_select %p482, %s32, 0
        %s484 = sadd.s32 %s483, %s481
        %s485 = smul.addr %s484, 8
        %s486 = scalar_lea.vmem %s11, %s485
        %v487 = vld [vmem:[%s471] sm:$0xff]
        %v488 = vld [vmem:[%s475] sm:$0xff]
        %v489 = vld [vmem:[%s479] sm:$0xff]
        %v490 = vld [vmem:[%s3] sm:$0xff]
        %v491 = vld [vmem:[%s3 + $0x8] sm:$0xff]
        %v492 = vld [vmem:[%s3 + $0x10] sm:$0xff]
        %v493 = vld [vmem:[%s3 + $0x18] sm:$0xff]
        %v494 = vld [vmem:[%s7] sm:$0x1]
        %v496 = vperm.slane %v494, 0
        %vm498 = vcmask 261120
        %v500 = vsel %vm498, %v487, 0
        %502 = vmatpush.msra.mxu0 0.0
        %503 = vmatpush.msra.mxu0 0.0
        %504 = vmatpush.msra.mxu0 0.0
        %505 = vmatpush.msra.mxu0 0.0
        %506 = vmatpush.msra.mxu0 0.0
        %507 = vmatpush.msra.mxu0 0.0
        %508 = vmatpush.msra.mxu0 0.0
        %509 = vmatpush.msra.mxu0 0.0
        %510 = vmatpush.msra.mxu0 0.0
        %511 = vmatpush.msra.mxu0 0.0
        %512 = vmatpush.msra.mxu0 0.0
        %513 = vmatpush.msra.mxu0 0.0
        %514 = vmatpush.msra.mxu0 %v493
        %515 = vmatpush.msra.mxu0 %v492
        %516 = vmatpush.msra.mxu0 %v491
        %517 = vmatpush.msra.mxu0 %v490
        %518 = vmatmul.f32.gmra.mxu0 %v500
        %v519 = vpop.f32.mrf.mxu0
        %v520 = vadd.f32 %v496, %v519
        %521 = vdwg.mxu0
        %v522 = vld [vmem:[%s4] sm:$0xff]
        %v523 = vld [vmem:[%s4 + $0x8] sm:$0xff]
        %v524 = vld [vmem:[%s4 + $0x10] sm:$0xff]
        %v525 = vld [vmem:[%s4 + $0x18] sm:$0xff]
        %v526 = vld [vmem:[%s8] sm:$0x1]
        %v528 = vperm.slane %v526, 0
        %v531 = vsel %vm498, %v488, 0
        %533 = vmatpush.msra.mxu0 0.0
        %534 = vmatpush.msra.mxu0 0.0
        %535 = vmatpush.msra.mxu0 0.0
        %536 = vmatpush.msra.mxu0 0.0
        %537 = vmatpush.msra.mxu0 0.0
        %538 = vmatpush.msra.mxu0 0.0
        %539 = vmatpush.msra.mxu0 0.0
        %540 = vmatpush.msra.mxu0 0.0
        %541 = vmatpush.msra.mxu0 0.0
        %542 = vmatpush.msra.mxu0 0.0
        %543 = vmatpush.msra.mxu0 0.0
        %544 = vmatpush.msra.mxu0 0.0
        %545 = vmatpush.msra.mxu0 %v525
        %546 = vmatpush.msra.mxu0 %v524
        %547 = vmatpush.msra.mxu0 %v523
        %548 = vmatpush.msra.mxu0 %v522
        %549 = vmatmul.f32.gmra.mxu0 %v531
        %v550 = vpop.f32.mrf.mxu0
        %v551 = vadd.f32 %v528, %v550
        %552 = vdwg.mxu0
        %v553 = vld [vmem:[%s5] sm:$0xff]
        %v554 = vld [vmem:[%s5 + $0x8] sm:$0xff]
        %v555 = vld [vmem:[%s5 + $0x10] sm:$0xff]
        %v556 = vld [vmem:[%s5 + $0x18] sm:$0xff]
        %v557 = vld [vmem:[%s9] sm:$0x1]
        %v559 = vperm.slane %v557, 0
        %v562 = vsel %vm498, %v489, 0
        %564 = vmatpush.msra.mxu0 0.0
        %565 = vmatpush.msra.mxu0 0.0
        %566 = vmatpush.msra.mxu0 0.0
        %567 = vmatpush.msra.mxu0 0.0
        %568 = vmatpush.msra.mxu0 0.0
        %569 = vmatpush.msra.mxu0 0.0
        %570 = vmatpush.msra.mxu0 0.0
        %571 = vmatpush.msra.mxu0 0.0
        %572 = vmatpush.msra.mxu0 0.0
        %573 = vmatpush.msra.mxu0 0.0
        %574 = vmatpush.msra.mxu0 0.0
        %575 = vmatpush.msra.mxu0 0.0
        %576 = vmatpush.msra.mxu0 %v556
        %577 = vmatpush.msra.mxu0 %v555
        %578 = vmatpush.msra.mxu0 %v554
        %579 = vmatpush.msra.mxu0 %v553
        %580 = vmatmul.f32.gmra.mxu0 %v562
        %v581 = vpop.f32.mrf.mxu0
        %v582 = vadd.f32 %v559, %v581
        %583 = vdwg.mxu0
        %vm584 = vcmask 64512
        %v586 = vsel %vm584, %v520, 0
        %v589 = vsel %vm584, %v551, 0
        %591 = vmatpush.xpose.msra.mxu0 0.0
        %592 = vmatpush.xpose.msra.mxu0 0.0
        %593 = vmatpush.xpose.msra.mxu0 0.0
        %594 = vmatpush.xpose.msra.mxu0 0.0
        %595 = vmatpush.xpose.msra.mxu0 0.0
        %596 = vmatpush.xpose.msra.mxu0 0.0
        %597 = vmatpush.xpose.msra.mxu0 0.0
        %598 = vmatpush.xpose.msra.mxu0 0.0
        %599 = vmatpush.xpose.msra.mxu0 0.0
        %600 = vmatpush.xpose.msra.mxu0 0.0
        %601 = vmatpush.xpose.msra.mxu0 0.0
        %602 = vmatpush.xpose.msra.mxu0 0.0
        %603 = vmatpush.xpose.msra.mxu0 0.0
        %604 = vmatpush.xpose.msra.mxu0 0.0
        %605 = vmatpush.xpose.msra.mxu0 0.0
        %606 = vmatpush.xpose.msra.mxu0 %v589
        %607 = vmatmul.f32.gmra.mxu0 %v586
        %v608 = vpop.f32.mrf.mxu0
        %v609 = vadd.f32 0.0, %v608
        %610 = vdwg.mxu0
        %v611 = vsel %vm584, %v609, -inf
        %612 = vmax.xlane.f32.xlu0 %v611
        %v613 = vpop.xlane.xlu0 %612
        %v614 = vsub.f32 %v609, %v613
        %v615 = vmul.f32 %v614, 1.442695
        %v616 = vpow.pop %v615
        %v617 = vsel %vm584, %v616, 0.0
        %618 = vadd.xlane.f32.xlu0 %v617
        %v619 = vpop.xlane.xlu0 %618
        %v620 = vrcp.pop %v619
        %v621 = vmul.f32 %v616, %v620
        %v622 = vadd.f32 %v621, 0.0
        %v624 = vsel %vm584, %v621, 0
        %626 = vmatpush.msra.mxu0 0.0
        %627 = vmatpush.msra.mxu0 0.0
        %628 = vmatpush.msra.mxu0 0.0
        %629 = vmatpush.msra.mxu0 0.0
        %630 = vmatpush.msra.mxu0 0.0
        %631 = vmatpush.msra.mxu0 0.0
        %632 = vmatpush.msra.mxu0 0.0
        %633 = vmatpush.msra.mxu0 0.0
        %634 = vmatpush.msra.mxu0 0.0
        %635 = vmatpush.msra.mxu0 0.0
        %636 = vmatpush.msra.mxu0 0.0
        %637 = vmatpush.msra.mxu0 0.0
        %638 = vmatpush.msra.mxu0 0.0
        %639 = vmatpush.msra.mxu0 0.0
        %640 = vmatpush.msra.mxu0 0.0
        %641 = vmatpush.msra.mxu0 %v582
        %642 = vmatmul.f32.gmra.mxu0 %v624
        %v643 = vpop.f32.mrf.mxu0
        %v644 = vadd.f32 0.0, %v643
        %645 = vdwg.mxu0
        %646 = vst.msk [vmem:[#allocation2] sm:$0xff] %vm584, %v644
        %647 = vrot.lane.b32.xlu0 %v520, 120
        %v648 = vpop.permute.xlu0 %647
        %649 = vrot.lane.b32.xlu0 %v551, 120
        %v650 = vpop.permute.xlu0 %649
        %v651 = vsel %vm584, %v648, 0
        %v653 = vsel %vm584, %v650, 0
        %655 = vmatpush.xpose.msra.mxu0 0.0
        %656 = vmatpush.xpose.msra.mxu0 0.0
        %657 = vmatpush.xpose.msra.mxu0 0.0
        %658 = vmatpush.xpose.msra.mxu0 0.0
        %659 = vmatpush.xpose.msra.mxu0 0.0
        %660 = vmatpush.xpose.msra.mxu0 0.0
        %661 = vmatpush.xpose.msra.mxu0 0.0
        %662 = vmatpush.xpose.msra.mxu0 0.0
        %663 = vmatpush.xpose.msra.mxu0 0.0
        %664 = vmatpush.xpose.msra.mxu0 0.0
        %665 = vmatpush.xpose.msra.mxu0 0.0
        %666 = vmatpush.xpose.msra.mxu0 0.0
        %667 = vmatpush.xpose.msra.mxu0 0.0
        %668 = vmatpush.xpose.msra.mxu0 0.0
        %669 = vmatpush.xpose.msra.mxu0 0.0
        %670 = vmatpush.xpose.msra.mxu0 %v653
        %671 = vmatmul.f32.gmra.mxu0 %v651
        %v672 = vpop.f32.mrf.mxu0
        %v673 = vadd.f32 0.0, %v672
        %674 = vdwg.mxu0
        %v675 = vsel %vm584, %v673, -inf
        %676 = vmax.xlane.f32.xlu0 %v675
        %v677 = vpop.xlane.xlu0 %676
        %v678 = vsub.f32 %v673, %v677
        %v679 = vmul.f32 %v678, 1.442695
        %v680 = vpow.pop %v679
        %v681 = vsel %vm584, %v680, 0.0
        %682 = vadd.xlane.f32.xlu0 %v681
        %v683 = vpop.xlane.xlu0 %682
        %v684 = vrcp.pop %v683
        %v685 = vmul.f32 %v680, %v684
        %v686 = vadd.f32 %v622, %v685
        %688 = vrot.lane.b32.xlu0 %v582, 120
        %v689 = vpop.permute.xlu0 %688
        %v692 = vsel %vm584, %v685, 0
        %694 = vmatpush.msra.mxu0 0.0
        %695 = vmatpush.msra.mxu0 0.0
        %696 = vmatpush.msra.mxu0 0.0
        %697 = vmatpush.msra.mxu0 0.0
        %698 = vmatpush.msra.mxu0 0.0
        %699 = vmatpush.msra.mxu0 0.0
        %700 = vmatpush.msra.mxu0 0.0
        %701 = vmatpush.msra.mxu0 0.0
        %702 = vmatpush.msra.mxu0 0.0
        %703 = vmatpush.msra.mxu0 0.0
        %704 = vmatpush.msra.mxu0 0.0
        %705 = vmatpush.msra.mxu0 0.0
        %706 = vmatpush.msra.mxu0 0.0
        %707 = vmatpush.msra.mxu0 0.0
        %708 = vmatpush.msra.mxu0 0.0
        %709 = vmatpush.msra.mxu0 %v689
        %710 = vmatmul.f32.gmra.mxu0 %v692
        %v711 = vpop.f32.mrf.mxu0
        %v712 = vadd.f32 0.0, %v711
        %713 = vdwg.mxu0
        %715 = vrot.lane.b32.xlu0 %v712, 8
        %v716 = vpop.permute.xlu0 %715
        %vm718 = vcmask 130112
        %719 = vst.msk [vmem:[#allocation2] sm:$0xff] %vm718, %v716
        %720 = vrot.lane.b32.xlu0 %v520, 112
        %v721 = vpop.permute.xlu0 %720
        %722 = vrot.lane.b32.xlu0 %v551, 112
        %v723 = vpop.permute.xlu0 %722
        %v724 = vsel %vm584, %v721, 0
        %v726 = vsel %vm584, %v723, 0
        %728 = vmatpush.xpose.msra.mxu0 0.0
        %729 = vmatpush.xpose.msra.mxu0 0.0
        %730 = vmatpush.xpose.msra.mxu0 0.0
        %731 = vmatpush.xpose.msra.mxu0 0.0
        %732 = vmatpush.xpose.msra.mxu0 0.0
        %733 = vmatpush.xpose.msra.mxu0 0.0
        %734 = vmatpush.xpose.msra.mxu0 0.0
        %735 = vmatpush.xpose.msra.mxu0 0.0
        %736 = vmatpush.xpose.msra.mxu0 0.0
        %737 = vmatpush.xpose.msra.mxu0 0.0
        %738 = vmatpush.xpose.msra.mxu0 0.0
        %739 = vmatpush.xpose.msra.mxu0 0.0
        %740 = vmatpush.xpose.msra.mxu0 0.0
        %741 = vmatpush.xpose.msra.mxu0 0.0
        %742 = vmatpush.xpose.msra.mxu0 0.0
        %743 = vmatpush.xpose.msra.mxu0 %v726
        %744 = vmatmul.f32.gmra.mxu0 %v724
        %v745 = vpop.f32.mrf.mxu0
        %v746 = vadd.f32 0.0, %v745
        %747 = vdwg.mxu0
        %v748 = vsel %vm584, %v746, -inf
        %749 = vmax.xlane.f32.xlu0 %v748
        %v750 = vpop.xlane.xlu0 %749
        %v751 = vsub.f32 %v746, %v750
        %v752 = vmul.f32 %v751, 1.442695
        %v753 = vpow.pop %v752
        %v754 = vsel %vm584, %v753, 0.0
        %755 = vadd.xlane.f32.xlu0 %v754
        %v756 = vpop.xlane.xlu0 %755
        %v757 = vrcp.pop %v756
        %v758 = vmul.f32 %v753, %v757
        %v759 = vadd.f32 %v686, %v758
        %760 = vrot.lane.b32.xlu0 %v582, 112
        %v761 = vpop.permute.xlu0 %760
        %v764 = vsel %vm584, %v758, 0
        %766 = vmatpush.msra.mxu0 0.0
        %767 = vmatpush.msra.mxu0 0.0
        %768 = vmatpush.msra.mxu0 0.0
        %769 = vmatpush.msra.mxu0 0.0
        %770 = vmatpush.msra.mxu0 0.0
        %771 = vmatpush.msra.mxu0 0.0
        %772 = vmatpush.msra.mxu0 0.0
        %773 = vmatpush.msra.mxu0 0.0
        %774 = vmatpush.msra.mxu0 0.0
        %775 = vmatpush.msra.mxu0 0.0
        %776 = vmatpush.msra.mxu0 0.0
        %777 = vmatpush.msra.mxu0 0.0
        %778 = vmatpush.msra.mxu0 0.0
        %779 = vmatpush.msra.mxu0 0.0
        %780 = vmatpush.msra.mxu0 0.0
        %781 = vmatpush.msra.mxu0 %v761
        %782 = vmatmul.f32.gmra.mxu0 %v764
        %v783 = vpop.f32.mrf.mxu0
        %v784 = vadd.f32 0.0, %v783
        %785 = vdwg.mxu0
        %787 = vrot.lane.b32.xlu0 %v784, 16
        %v788 = vpop.permute.xlu0 %787
        %vm790 = vcmask 195712
        %791 = vst.msk [vmem:[#allocation2] sm:$0xff] %vm790, %v788
        %792 = vrot.lane.b32.xlu0 %v520, 104
        %v793 = vpop.permute.xlu0 %792
        %794 = vrot.lane.b32.xlu0 %v551, 104
        %v795 = vpop.permute.xlu0 %794
        %v796 = vsel %vm584, %v793, 0
        %v798 = vsel %vm584, %v795, 0
        %800 = vmatpush.xpose.msra.mxu0 0.0
        %801 = vmatpush.xpose.msra.mxu0 0.0
        %802 = vmatpush.xpose.msra.mxu0 0.0
        %803 = vmatpush.xpose.msra.mxu0 0.0
        %804 = vmatpush.xpose.msra.mxu0 0.0
        %805 = vmatpush.xpose.msra.mxu0 0.0
        %806 = vmatpush.xpose.msra.mxu0 0.0
        %807 = vmatpush.xpose.msra.mxu0 0.0
        %808 = vmatpush.xpose.msra.mxu0 0.0
        %809 = vmatpush.xpose.msra.mxu0 0.0
        %810 = vmatpush.xpose.msra.mxu0 0.0
        %811 = vmatpush.xpose.msra.mxu0 0.0
        %812 = vmatpush.xpose.msra.mxu0 0.0
        %813 = vmatpush.xpose.msra.mxu0 0.0
        %814 = vmatpush.xpose.msra.mxu0 0.0
        %815 = vmatpush.xpose.msra.mxu0 %v798
        %816 = vmatmul.f32.gmra.mxu0 %v796
        %v817 = vpop.f32.mrf.mxu0
        %v818 = vadd.f32 0.0, %v817
        %819 = vdwg.mxu0
        %v820 = vsel %vm584, %v818, -inf
        %821 = vmax.xlane.f32.xlu0 %v820
        %v822 = vpop.xlane.xlu0 %821
        %v823 = vsub.f32 %v818, %v822
        %v824 = vmul.f32 %v823, 1.442695
        %v825 = vpow.pop %v824
        %v826 = vsel %vm584, %v825, 0.0
        %827 = vadd.xlane.f32.xlu0 %v826
        %v828 = vpop.xlane.xlu0 %827
        %v829 = vrcp.pop %v828
        %v830 = vmul.f32 %v825, %v829
        %v831 = vadd.f32 %v759, %v830
        %832 = vrot.lane.b32.xlu0 %v582, 104
        %v833 = vpop.permute.xlu0 %832
        %v836 = vsel %vm584, %v830, 0
        %838 = vmatpush.msra.mxu0 0.0
        %839 = vmatpush.msra.mxu0 0.0
        %840 = vmatpush.msra.mxu0 0.0
        %841 = vmatpush.msra.mxu0 0.0
        %842 = vmatpush.msra.mxu0 0.0
        %843 = vmatpush.msra.mxu0 0.0
        %844 = vmatpush.msra.mxu0 0.0
        %845 = vmatpush.msra.mxu0 0.0
        %846 = vmatpush.msra.mxu0 0.0
        %847 = vmatpush.msra.mxu0 0.0
        %848 = vmatpush.msra.mxu0 0.0
        %849 = vmatpush.msra.mxu0 0.0
        %850 = vmatpush.msra.mxu0 0.0
        %851 = vmatpush.msra.mxu0 0.0
        %852 = vmatpush.msra.mxu0 0.0
        %853 = vmatpush.msra.mxu0 %v833
        %854 = vmatmul.f32.gmra.mxu0 %v836
        %v855 = vpop.f32.mrf.mxu0
        %v856 = vadd.f32 0.0, %v855
        %857 = vdwg.mxu0
        %859 = vrot.lane.b32.xlu0 %v856, 24
        %v860 = vpop.permute.xlu0 %859
        %vm862 = vcmask 261312
        %863 = vst.msk [vmem:[#allocation2] sm:$0xff] %vm862, %v860
        %v864 = vmul.f32 %v831, 0.25
        %865 = vst.msk [vmem:[%s464] sm:$0xff] %vm584, %v864
        %v866 = vld [vmem:[#allocation2] sm:$0xff]
        %v867 = vld [vmem:[%s6] sm:$0xff]
        %v868 = vld [vmem:[%s6 + $0x8] sm:$0xff]
        %v869 = vld [vmem:[%s6 + $0x10] sm:$0xff]
        %v870 = vld [vmem:[%s6 + $0x18] sm:$0xff]
        %v871 = vld [vmem:[%s10] sm:$0x1]
        %v873 = vperm.slane %v871, 0
        %v876 = vsel %vm498, %v866, 0
        %878 = vmatpush.msra.mxu0 0.0
        %879 = vmatpush.msra.mxu0 0.0
        %880 = vmatpush.msra.mxu0 0.0
        %881 = vmatpush.msra.mxu0 0.0
        %882 = vmatpush.msra.mxu0 0.0
        %883 = vmatpush.msra.mxu0 0.0
        %884 = vmatpush.msra.mxu0 0.0
        %885 = vmatpush.msra.mxu0 0.0
        %886 = vmatpush.msra.mxu0 0.0
        %887 = vmatpush.msra.mxu0 0.0
        %888 = vmatpush.msra.mxu0 0.0
        %889 = vmatpush.msra.mxu0 0.0
        %890 = vmatpush.msra.mxu0 %v870
        %891 = vmatpush.msra.mxu0 %v869
        %892 = vmatpush.msra.mxu0 %v868
        %893 = vmatpush.msra.mxu0 %v867
        %894 = vmatmul.f32.gmra.mxu0 %v876
        %v895 = vpop.f32.mrf.mxu0
        %v896 = vadd.f32 %v873, %v895
        %897 = vdwg.mxu0
        %898 = vst.msk [vmem:[%s486] sm:$0xff] %vm498, %v896
        %p899 = scmp.lt.s32.totalorder %s31, 1
        %s900 = scalar_select %p899, %s31, 1
        %p901 = scmp.lt.s32.totalorder %s32, 0
        %s902 = scalar_select %p901, %s32, 0
        %s903 = sadd.s32 %s902, %s900
        %s904 = smul.addr %s903, 8
        %s905 = scalar_lea.vmem %s11, %s904
        %s906 = sand.u32 %s325, 1
        %s907 = scalar_lea.sflag [#allocation4], %s906
        %s908 = sand.u32 %s325, 1
        %s909 = smul.addr %s908, 8
        %s910 = scalar_lea.vmem [#allocation3], %s909
        // Predicated region
        $region65: #{custom_mha_forward.1} parent=63 // pred_check
          %p911 = pneg %p307
        $region66: #{custom_mha_forward.1} parent=63 // pred_check_branch
          %913 = sbr.rel (%p911) target = $region68
        $region67: #{custom_mha_forward.1} parent=63 // pred_region
          _
        $region68: #{custom_mha_forward.1} parent=63 // pred_fallthru
          _
        // Predicated region
        $region69: #{custom_mha_forward.1} parent=63 // pred_check
          %p914 = pneg %p335
        $region70: #{custom_mha_forward.1} parent=63 // pred_check_branch
          %916 = sbr.rel (%p914) target = $region72
        $region71: #{custom_mha_forward.1} parent=63 // pred_region
          %918 = vsyncadd %s907, 0
          %s919 = sadd.s32 %s32, %s31
          %s920 = smul.addr %s919, 8
          %s921 = scalar_lea.hbm %s12, %s920
          %s923 = sshll.u32 %s910, 4
          %s924 = int_to_ptr.vmem [resolvable:$true] %s923
          %s925 = sshll.u32 %s921, 4
          %s926 = int_to_ptr.hbm [resolvable:$true] %s925
          %928 = dma.vmem_to_hbm [thread:$0]  %s924, 128, %s926, %s907
        $region72: #{custom_mha_forward.1} parent=63 // pred_fallthru
          _
      $region64: #{custom_mha_forward.1} parent=5 // pred_fallthru
        _
      %p929 = scmp.le.s32.totalorder 2, %s22
      // Predicated region
      $region73: #{custom_mha_forward.1} parent=5 // pred_check
        %p930 = pneg %p929
      $region74: #{custom_mha_forward.1} parent=5 // pred_check_branch
        %932 = sbr.rel (%p930) target = $region76
      $region75: #{custom_mha_forward.1} parent=5 // pred_region
        %s933 = ssub.s32 %s22, 2
        // Predicated region
        $region77: #{custom_mha_forward.1} parent=75 // pred_check
          %p934 = pneg %p313
        $region78: #{custom_mha_forward.1} parent=75 // pred_check_branch
          %936 = sbr.rel (%p934) target = $region80
        $region79: #{custom_mha_forward.1} parent=75 // pred_region
          %p937 = scmp.lt.s32.totalorder %s33, 1
          %s938 = scalar_select %p937, %s33, 1
          %p939 = scmp.lt.s32.totalorder %s34, 0
          %s940 = scalar_select %p939, %s34, 0
          %s941 = sadd.s32 %s940, %s938
          %s942 = smul.addr %s941, 8
          %s943 = scalar_lea.vmem %s11, %s942
        $region80: #{custom_mha_forward.1} parent=75 // pred_fallthru
          _
        // Predicated region
        $region81: #{custom_mha_forward.1} parent=75 // pred_check
          %p944 = pneg %p341
        $region82: #{custom_mha_forward.1} parent=75 // pred_check_branch
          %946 = sbr.rel (%p944) target = $region84
        $region83: #{custom_mha_forward.1} parent=75 // pred_region
          %s947 = sand.u32 %s326, 1
          %s948 = scalar_lea.sflag [#allocation4], %s947
          %s949 = sand.u32 %s326, 1
          %s950 = smul.addr %s949, 8
          %s951 = scalar_lea.vmem [#allocation3], %s950
          %953 = dma.done %s948, 128
        $region84: #{custom_mha_forward.1} parent=75 // pred_fallthru
          _
      $region76: #{custom_mha_forward.1} parent=5 // pred_fallthru
        _
    $region6: #{custom_mha_forward.1} parent=1 // loop_footer
      %s26 = sadd.s32 1, %s22
    $region7: #{custom_mha_forward.1} parent=1 // loop_footer_branch
      %21 = sbr.rel target = $region3
    $region8: #{custom_mha_forward.1} parent=1 // loop_exit
      _
    %954 = vsyncpa [#allocation4], 1
    %s955 = scalar_lea.sflag [#allocation4], 1
    %956 = vsyncpa %s955, 1

</llo_original>
